<compile_context>
chip_gen: v7x
topology: tpu7x:2x2x1
jax: 0.10.0
libtpu: 0.0.40
codegen_flags: <defaults>
</compile_context>

<pallas_src>
import functools

import jax
import jax.numpy as jnp
from jax import lax
from jax.experimental import pallas as pl
from jax.experimental.pallas import tpu as pltpu


def _round_up(x, m):
    return (x + m - 1) // m * m


def _neuralcf_kernel(num_hidden_layers, *refs):
    """Per batch-tile NeuralCF forward.

    refs = (gmf_u, gmf_i, mlp_u, mlp_i,            # (TB, feat) activation tiles
            W0_u, W0_i, b0,                        # first MLP layer, concat pre-split
            [W_k, b_k] * num_hidden_layers,        # remaining dnn_network layers
            W_lin, b_lin,                          # linear: layers[-1] -> mf_dim
            w2_gmf, w2_mlp, b2,                    # linear2 rows (1, mf_dim) + bias (1, 1)
            out_ref)                               # (1, TB) lane-dense logits->sigmoid
    """
    gmf_u_ref, gmf_i_ref, mlp_u_ref, mlp_i_ref = refs[:4]
    out_ref = refs[-1]
    p = refs[4:-1]

    def dot(a, w_ref):
        w = w_ref[...]
        return jnp.dot(a.astype(w.dtype), w, preferred_element_type=jnp.float32)

    def row_dot(w_row_ref, act_f32):
        # (1, F) contracted with (TB, F) over F -> (1, TB).  Produces the
        # logits already transposed so the output store is lane-dense.
        return lax.dot_general(
            w_row_ref[...], act_f32,
            dimension_numbers=(((1,), (1,)), ((), ())),
            preferred_element_type=jnp.float32)

    # GMF branch: elementwise product, kept in f32 on the VPU.
    gmf_vec = (gmf_u_ref[...].astype(jnp.float32)
               * gmf_i_ref[...].astype(jnp.float32))

    # MLP branch.  concat([mlp_u, mlp_i], 1) @ W0 folded into two matmuls with
    # the weight already split in the wrapper.
    x = dot(mlp_u_ref[...], p[0]) + dot(mlp_i_ref[...], p[1]) + p[2][...]
    x = jnp.maximum(x, 0.0)

    idx = 3
    for _ in range(num_hidden_layers):
        x = jnp.maximum(dot(x, p[idx]) + p[idx + 1][...], 0.0)
        idx += 2

    # self.linear: layers[-1] -> mf_dim (no activation).
    mlp_vec = dot(x, p[idx]) + p[idx + 1][...]
    idx += 2

    # self.linear2 on concat([gmf_vec, mlp_vec], 1) with out_features == 1,
    # computed as two transposed rank-1 matmuls so the result is (1, TB).
    w2_gmf_ref, w2_mlp_ref, b2_ref = p[idx], p[idx + 1], p[idx + 2]
    logit = (row_dot(w2_gmf_ref, gmf_vec)
             + row_dot(w2_mlp_ref, mlp_vec)
             + b2_ref[...])

    out_ref[...] = jax.nn.sigmoid(logit)


def init_params(key, num_user, num_item, mf_dim, layers):
    """Deterministic parameter init mirroring the module's shapes."""
    ks = jax.random.split(key, 16)
    half = layers[0] // 2

    def xavier_normal(k, shape):
        fan_in, fan_out = shape[1], shape[0]  # nn.Embedding weight: (rows, dim)
        std = (2.0 / (fan_in + fan_out)) ** 0.5
        return std * jax.random.normal(k, shape, dtype=jnp.float32)

    def linear(k, in_dim, out_dim):
        k_w, k_b = jax.random.split(k)
        bound = 1.0 / (in_dim ** 0.5)
        # store weight already transposed: (in, out)
        w = jax.random.uniform(k_w, (in_dim, out_dim), jnp.float32, -bound, bound)
        b = jax.random.uniform(k_b, (1, out_dim), jnp.float32, -bound, bound)
        return w, b

    params = {
        "gmf_user": xavier_normal(ks[0], (num_user, mf_dim)),
        "gmf_item": xavier_normal(ks[1], (num_item, mf_dim)),
        "mlp_user": xavier_normal(ks[2], (num_user, half)),
        "mlp_item": xavier_normal(ks[3], (num_item, half)),
    }
    dnn = []
    for i, (d_in, d_out) in enumerate(zip(layers[:-1], layers[1:])):
        dnn.append(linear(ks[4 + i], d_in, d_out))
    params["dnn"] = dnn
    params["linear"] = linear(ks[12], layers[-1], mf_dim)
    params["linear2"] = linear(ks[13], 2 * mf_dim, 1)
    return params


def neuralcf_forward(user_indices, item_indices, params, mf_dim, layers,
                     *, block_batch=None, use_bf16=False):
    emb_dtype = jnp.bfloat16 if use_bf16 else jnp.float32

    # Embedding lookups (gather) — plain-JAX glue.
    gmf_u = params["gmf_user"][user_indices].astype(emb_dtype)
    gmf_i = params["gmf_item"][item_indices].astype(emb_dtype)
    mlp_u = params["mlp_user"][user_indices].astype(emb_dtype)
    mlp_i = params["mlp_item"][item_indices].astype(emb_dtype)

    batch = user_indices.shape[0]
    half = layers[0] // 2
    num_dnn = len(layers) - 1

    # Batch tiling: biggest tile wins in this memory-bound regime; keep the
    # tile a multiple of 8 (f32 sublane) and pad the batch to whole tiles.
    if block_batch is None:
        block_batch = min(_round_up(batch, 8), 1024)
    block_batch = _round_up(block_batch, 8)
    if _round_up(batch, block_batch) != block_batch:
        # Multi-tile grid: keep the lane-dense (1, block_batch) output block
        # 128-aligned so it satisfies the (8, 128) block constraint.
        block_batch = _round_up(block_batch, 128)
    b_pad = _round_up(batch, block_batch)
    if b_pad != batch:
        pad = ((0, b_pad - batch), (0, 0))
        gmf_u = jnp.pad(gmf_u, pad)
        gmf_i = jnp.pad(gmf_i, pad)
        mlp_u = jnp.pad(mlp_u, pad)
        mlp_i = jnp.pad(mlp_i, pad)

    # Pre-split the concat weights in the wrapper (free in XLA; avoids
    # unaligned in-kernel slicing -> relayout copies).
    W0, b0 = params["dnn"][0]
    W_lin, b_lin = params["linear"]
    W2, b2 = params["linear2"]
    kernel_args = [gmf_u, gmf_i, mlp_u, mlp_i,
                   W0[:half, :].astype(emb_dtype),
                   W0[half:, :].astype(emb_dtype),
                   b0]
    for w, b in params["dnn"][1:]:
        kernel_args += [w.astype(emb_dtype), b]
    kernel_args += [W_lin.astype(emb_dtype), b_lin]
    kernel_args += [W2[:mf_dim, 0].reshape(1, mf_dim),
                    W2[mf_dim:, 0].reshape(1, mf_dim),
                    b2]

    def act_spec(feat):
        return pl.BlockSpec((block_batch, feat), lambda i: (i, 0))

    def resident_spec(arr):
        # Full-shape block, constant index map -> weight stays resident in VMEM.
        return pl.BlockSpec(arr.shape, lambda i: (0, 0))

    in_specs = [act_spec(mf_dim), act_spec(mf_dim),
                act_spec(half), act_spec(half)]
    in_specs += [resident_spec(a) for a in kernel_args[4:]]
    # Lane-dense output: logits are produced as a (1, block_batch) row.
    out_spec = pl.BlockSpec((1, block_batch), lambda i: (0, i))

    grid = (b_pad // block_batch,)

    # Rough VMEM budget: double-buffered activation/output tiles + resident
    # weights + activation temporaries; clamp to what every generation has
    # (32 MiB scoped default, 64 MiB physical on v7x).
    itemsize = 2 if use_bf16 else 4
    act_bytes = block_batch * (2 * mf_dim + 2 * half) * itemsize
    w_bytes = sum(int(a.size) * a.dtype.itemsize for a in kernel_args[4:])
    tmp_bytes = 4 * block_batch * max(list(layers) + [mf_dim]) * 4
    vmem_budget = 2 * (act_bytes + block_batch * 4) + 2 * w_bytes + tmp_bytes
    vmem_limit = int(min(max(2 * vmem_budget, 32 << 20), 64 << 20))

    flops = (2 * b_pad * (sum(a * b for a, b in zip(layers[:-1], layers[1:]))
                          + layers[-1] * mf_dim + 2 * mf_dim)
             + b_pad * mf_dim)
    bytes_accessed = (sum(int(a.size) * a.dtype.itemsize for a in kernel_args)
                      + b_pad * 4)

    out = pl.pallas_call(
        functools.partial(_neuralcf_kernel, num_dnn - 1),
        out_shape=jax.ShapeDtypeStruct((1, b_pad), jnp.float32),
        grid=grid,
        in_specs=in_specs,
        out_specs=out_spec,
        compiler_params=pltpu.CompilerParams(
            dimension_semantics=("parallel",),
            vmem_limit_bytes=vmem_limit),
        cost_estimate=pl.CostEstimate(
            flops=int(flops),
            transcendentals=int(b_pad),
            bytes_accessed=int(bytes_accessed)),
    )(*kernel_args)
    return out[0, :batch, None]


def neuralcf_reference(user_indices, item_indices, params, mf_dim, layers):
    gmf_u = params["gmf_user"][user_indices]
    gmf_i = params["gmf_item"][item_indices]
    mlp_u = params["mlp_user"][user_indices]
    mlp_i = params["mlp_item"][item_indices]
    gmf_vec = gmf_u * gmf_i
    x = jnp.concatenate([mlp_u, mlp_i], axis=1)
    for w, b in params["dnn"]:
        x = jax.nn.relu(x @ w + b)
    w, b = params["linear"]
    mlp_vec = x @ w + b
    vector = jnp.concatenate([gmf_vec, mlp_vec], axis=1)
    w2, b2 = params["linear2"]
    return jax.nn.sigmoid(vector @ w2 + b2)


if __name__ == "__main__":
    num_user, num_item = 32, 40
    mf_dim = 8
    layers = [32, 16, 8]
    batch = 8

    key = jax.random.PRNGKey(0)
    k_params, k_u, k_i = jax.random.split(key, 3)
    params = init_params(k_params, num_user, num_item, mf_dim, layers)

    user_indices = jax.random.randint(k_u, (batch,), 0, num_user, dtype=jnp.int32)
    item_indices = jax.random.randint(k_i, (batch,), 0, num_item, dtype=jnp.int32)

    out = neuralcf_forward(user_indices, item_indices, params, mf_dim, layers,
                           use_bf16=False)
    out = jax.block_until_ready(out)

    ref = neuralcf_reference(user_indices, item_indices, params, mf_dim, layers)
    assert out.shape == (batch, 1)
    assert jnp.allclose(out, ref, atol=1e-5, rtol=1e-5)

    print("KERNEL_OK")
</pallas_src>

<mosaic_0001>
module attributes {stable_mosaic.version = 11 : i64} {
  func.func @_neuralcf_kernel(%arg0: i32, %arg1: memref<8x8xf32, #tpu.memory_space<vmem>>, %arg2: memref<8x8xf32, #tpu.memory_space<vmem>>, %arg3: memref<8x16xf32, #tpu.memory_space<vmem>>, %arg4: memref<8x16xf32, #tpu.memory_space<vmem>>, %arg5: memref<16x16xf32, #tpu.memory_space<vmem>>, %arg6: memref<16x16xf32, #tpu.memory_space<vmem>>, %arg7: memref<1x16xf32, #tpu.memory_space<vmem>>, %arg8: memref<16x8xf32, #tpu.memory_space<vmem>>, %arg9: memref<1x8xf32, #tpu.memory_space<vmem>>, %arg10: memref<8x8xf32, #tpu.memory_space<vmem>>, %arg11: memref<1x8xf32, #tpu.memory_space<vmem>>, %arg12: memref<1x8xf32, #tpu.memory_space<vmem>>, %arg13: memref<1x8xf32, #tpu.memory_space<vmem>>, %arg14: memref<1x1xf32, #tpu.memory_space<vmem>>, %arg15: memref<1x8xf32, #tpu.memory_space<vmem>>) attributes {dimension_semantics = [#tpu.dimension_semantics<parallel>], iteration_bounds = array<i64: 1>, scalar_prefetch = 0 : i64, scratch_operands = 0 : i64, tpu.core_type = #tpu.core_type<tc>, window_params = [{transform_indices = @transform_0, window_bounds = array<i64: 8, 8>}, {transform_indices = @transform_1, window_bounds = array<i64: 8, 8>}, {transform_indices = @transform_2, window_bounds = array<i64: 8, 16>}, {transform_indices = @transform_3, window_bounds = array<i64: 8, 16>}, {pipeline_mode = #tpu.pipeline_mode<synchronous>, transform_indices = @transform_4, window_bounds = array<i64: 16, 16>}, {pipeline_mode = #tpu.pipeline_mode<synchronous>, transform_indices = @transform_5, window_bounds = array<i64: 16, 16>}, {pipeline_mode = #tpu.pipeline_mode<synchronous>, transform_indices = @transform_6, window_bounds = array<i64: 1, 16>}, {pipeline_mode = #tpu.pipeline_mode<synchronous>, transform_indices = @transform_7, window_bounds = array<i64: 16, 8>}, {pipeline_mode = #tpu.pipeline_mode<synchronous>, transform_indices = @transform_8, window_bounds = array<i64: 1, 8>}, {pipeline_mode = #tpu.pipeline_mode<synchronous>, transform_indices = @transform_9, window_bounds = array<i64: 8, 8>}, {pipeline_mode = #tpu.pipeline_mode<synchronous>, transform_indices = @transform_10, window_bounds = array<i64: 1, 8>}, {pipeline_mode = #tpu.pipeline_mode<synchronous>, transform_indices = @transform_11, window_bounds = array<i64: 1, 8>}, {pipeline_mode = #tpu.pipeline_mode<synchronous>, transform_indices = @transform_12, window_bounds = array<i64: 1, 8>}, {pipeline_mode = #tpu.pipeline_mode<synchronous>, transform_indices = @transform_13, window_bounds = array<i64: 1, 1>}, {transform_indices = @transform_14, window_bounds = array<i64: 1, 8>}]} {
    %c0 = arith.constant 0 : index
    %c0_0 = arith.constant 0 : index
    %0 = vector.load %arg1[%c0, %c0_0] : memref<8x8xf32, #tpu.memory_space<vmem>>, vector<8x8xf32>
    %c0_1 = arith.constant 0 : index
    %c0_2 = arith.constant 0 : index
    %1 = vector.load %arg2[%c0_1, %c0_2] : memref<8x8xf32, #tpu.memory_space<vmem>>, vector<8x8xf32>
    %2 = arith.mulf %0, %1 : vector<8x8xf32>
    %c0_3 = arith.constant 0 : index
    %c0_4 = arith.constant 0 : index
    %3 = vector.load %arg3[%c0_3, %c0_4] : memref<8x16xf32, #tpu.memory_space<vmem>>, vector<8x16xf32>
    %c0_5 = arith.constant 0 : index
    %c0_6 = arith.constant 0 : index
    %4 = vector.load %arg5[%c0_5, %c0_6] : memref<16x16xf32, #tpu.memory_space<vmem>>, vector<16x16xf32>
    %cst = arith.constant dense<0.000000e+00> : vector<8x16xf32>
    %5 = tpu.matmul %3, %4, %cst {dimension_numbers = #tpu.dot_dimension_numbers<[1], [0], [0], [1], [0, 0, 1, 1], [], []>} : vector<8x16xf32>, vector<16x16xf32>, vector<8x16xf32> -> vector<8x16xf32>
    %c0_7 = arith.constant 0 : index
    %c0_8 = arith.constant 0 : index
    %6 = vector.load %arg4[%c0_7, %c0_8] : memref<8x16xf32, #tpu.memory_space<vmem>>, vector<8x16xf32>
    %c0_9 = arith.constant 0 : index
    %c0_10 = arith.constant 0 : index
    %7 = vector.load %arg6[%c0_9, %c0_10] : memref<16x16xf32, #tpu.memory_space<vmem>>, vector<16x16xf32>
    %cst_11 = arith.constant dense<0.000000e+00> : vector<8x16xf32>
    %8 = tpu.matmul %6, %7, %cst_11 {dimension_numbers = #tpu.dot_dimension_numbers<[1], [0], [0], [1], [0, 0, 1, 1], [], []>} : vector<8x16xf32>, vector<16x16xf32>, vector<8x16xf32> -> vector<8x16xf32>
    %9 = arith.addf %5, %8 : vector<8x16xf32>
    %c0_12 = arith.constant 0 : index
    %c0_13 = arith.constant 0 : index
    %10 = vector.load %arg7[%c0_12, %c0_13] : memref<1x16xf32, #tpu.memory_space<vmem>>, vector<1x16xf32>
    %11 = vector.broadcast %10 : vector<1x16xf32> to vector<8x16xf32>
    %12 = arith.addf %9, %11 : vector<8x16xf32>
    %cst_14 = arith.constant 0.000000e+00 : f32
    %13 = vector.broadcast %cst_14 : f32 to vector<8x16xf32>
    %14 = arith.maximumf %12, %13 : vector<8x16xf32>
    %c0_15 = arith.constant 0 : index
    %c0_16 = arith.constant 0 : index
    %15 = vector.load %arg8[%c0_15, %c0_16] : memref<16x8xf32, #tpu.memory_space<vmem>>, vector<16x8xf32>
    %cst_17 = arith.constant dense<0.000000e+00> : vector<8x8xf32>
    %16 = tpu.matmul %14, %15, %cst_17 {dimension_numbers = #tpu.dot_dimension_numbers<[1], [0], [0], [1], [0, 0, 1, 1], [], []>} : vector<8x16xf32>, vector<16x8xf32>, vector<8x8xf32> -> vector<8x8xf32>
    %c0_18 = arith.constant 0 : index
    %c0_19 = arith.constant 0 : index
    %17 = vector.load %arg9[%c0_18, %c0_19] : memref<1x8xf32, #tpu.memory_space<vmem>>, vector<1x8xf32>
    %18 = vector.broadcast %17 : vector<1x8xf32> to vector<8x8xf32>
    %19 = arith.addf %16, %18 : vector<8x8xf32>
    %cst_20 = arith.constant 0.000000e+00 : f32
    %20 = vector.broadcast %cst_20 : f32 to vector<8x8xf32>
    %21 = arith.maximumf %19, %20 : vector<8x8xf32>
    %c0_21 = arith.constant 0 : index
    %c0_22 = arith.constant 0 : index
    %22 = vector.load %arg10[%c0_21, %c0_22] : memref<8x8xf32, #tpu.memory_space<vmem>>, vector<8x8xf32>
    %cst_23 = arith.constant dense<0.000000e+00> : vector<8x8xf32>
    %23 = tpu.matmul %21, %22, %cst_23 {dimension_numbers = #tpu.dot_dimension_numbers<[1], [0], [0], [1], [0, 0, 1, 1], [], []>} : vector<8x8xf32>, vector<8x8xf32>, vector<8x8xf32> -> vector<8x8xf32>
    %c0_24 = arith.constant 0 : index
    %c0_25 = arith.constant 0 : index
    %24 = vector.load %arg11[%c0_24, %c0_25] : memref<1x8xf32, #tpu.memory_space<vmem>>, vector<1x8xf32>
    %25 = vector.broadcast %24 : vector<1x8xf32> to vector<8x8xf32>
    %26 = arith.addf %23, %25 : vector<8x8xf32>
    %c0_26 = arith.constant 0 : index
    %c0_27 = arith.constant 0 : index
    %27 = vector.load %arg12[%c0_26, %c0_27] : memref<1x8xf32, #tpu.memory_space<vmem>>, vector<1x8xf32>
    %cst_28 = arith.constant dense<0.000000e+00> : vector<1x8xf32>
    %28 = tpu.matmul %27, %2, %cst_28 {dimension_numbers = #tpu.dot_dimension_numbers<[1], [1], [0], [0], [0, 0, 1, 0], [], []>} : vector<1x8xf32>, vector<8x8xf32>, vector<1x8xf32> -> vector<1x8xf32>
    %c0_29 = arith.constant 0 : index
    %c0_30 = arith.constant 0 : index
    %29 = vector.load %arg13[%c0_29, %c0_30] : memref<1x8xf32, #tpu.memory_space<vmem>>, vector<1x8xf32>
    %cst_31 = arith.constant dense<0.000000e+00> : vector<1x8xf32>
    %30 = tpu.matmul %29, %26, %cst_31 {dimension_numbers = #tpu.dot_dimension_numbers<[1], [1], [0], [0], [0, 0, 1, 0], [], []>} : vector<1x8xf32>, vector<8x8xf32>, vector<1x8xf32> -> vector<1x8xf32>
    %31 = arith.addf %28, %30 : vector<1x8xf32>
    %c0_32 = arith.constant 0 : index
    %c0_33 = arith.constant 0 : index
    %32 = vector.load %arg14[%c0_32, %c0_33] : memref<1x1xf32, #tpu.memory_space<vmem>>, vector<1x1xf32>
    %33 = vector.broadcast %32 : vector<1x1xf32> to vector<1x8xf32>
    %34 = arith.addf %31, %33 : vector<1x8xf32>
    %35 = arith.negf %34 : vector<1x8xf32>
    %36 = math.exp %35 : vector<1x8xf32>
    %cst_34 = arith.constant 1.000000e+00 : f32
    %37 = vector.broadcast %cst_34 : f32 to vector<1x8xf32>
    %38 = arith.addf %37, %36 : vector<1x8xf32>
    %39 = arith.divf %37, %38 : vector<1x8xf32>
    %c0_35 = arith.constant 0 : index
    %c0_36 = arith.constant 0 : index
    %40 = vector.load %arg15[%c0_35, %c0_36] : memref<1x8xf32, #tpu.memory_space<vmem>>, vector<1x8xf32>
    tpu.vector_store %arg15[%c0_35, %c0_36], %39 {strides = array<i32>} : memref<1x8xf32, #tpu.memory_space<vmem>>, vector<1x8xf32>,
    return
  }
  func.func @transform_0(%arg0: i32) -> (i32, i32) {
    %c0_i32 = arith.constant 0 : i32
    %c0_i32_0 = arith.constant 0 : i32
    return %arg0, %c0_i32 : i32, i32
  }
  func.func @transform_1(%arg0: i32) -> (i32, i32) {
    %c0_i32 = arith.constant 0 : i32
    %c0_i32_0 = arith.constant 0 : i32
    return %arg0, %c0_i32 : i32, i32
  }
  func.func @transform_2(%arg0: i32) -> (i32, i32) {
    %c0_i32 = arith.constant 0 : i32
    %c0_i32_0 = arith.constant 0 : i32
    return %arg0, %c0_i32 : i32, i32
  }
  func.func @transform_3(%arg0: i32) -> (i32, i32) {
    %c0_i32 = arith.constant 0 : i32
    %c0_i32_0 = arith.constant 0 : i32
    return %arg0, %c0_i32 : i32, i32
  }
  func.func @transform_4(%arg0: i32) -> (i32, i32) {
    %c0_i32 = arith.constant 0 : i32
    %c0_i32_0 = arith.constant 0 : i32
    %c0_i32_1 = arith.constant 0 : i32
    return %c0_i32, %c0_i32_0 : i32, i32
  }
  func.func @transform_5(%arg0: i32) -> (i32, i32) {
    %c0_i32 = arith.constant 0 : i32
    %c0_i32_0 = arith.constant 0 : i32
    %c0_i32_1 = arith.constant 0 : i32
    return %c0_i32, %c0_i32_0 : i32, i32
  }
  func.func @transform_6(%arg0: i32) -> (i32, i32) {
    %c0_i32 = arith.constant 0 : i32
    %c0_i32_0 = arith.constant 0 : i32
    %c0_i32_1 = arith.constant 0 : i32
    return %c0_i32, %c0_i32_0 : i32, i32
  }
  func.func @transform_7(%arg0: i32) -> (i32, i32) {
    %c0_i32 = arith.constant 0 : i32
    %c0_i32_0 = arith.constant 0 : i32
    %c0_i32_1 = arith.constant 0 : i32
    return %c0_i32, %c0_i32_0 : i32, i32
  }
  func.func @transform_8(%arg0: i32) -> (i32, i32) {
    %c0_i32 = arith.constant 0 : i32
    %c0_i32_0 = arith.constant 0 : i32
    %c0_i32_1 = arith.constant 0 : i32
    return %c0_i32, %c0_i32_0 : i32, i32
  }
  func.func @transform_9(%arg0: i32) -> (i32, i32) {
    %c0_i32 = arith.constant 0 : i32
    %c0_i32_0 = arith.constant 0 : i32
    %c0_i32_1 = arith.constant 0 : i32
    return %c0_i32, %c0_i32_0 : i32, i32
  }
  func.func @transform_10(%arg0: i32) -> (i32, i32) {
    %c0_i32 = arith.constant 0 : i32
    %c0_i32_0 = arith.constant 0 : i32
    %c0_i32_1 = arith.constant 0 : i32
    return %c0_i32, %c0_i32_0 : i32, i32
  }
  func.func @transform_11(%arg0: i32) -> (i32, i32) {
    %c0_i32 = arith.constant 0 : i32
    %c0_i32_0 = arith.constant 0 : i32
    %c0_i32_1 = arith.constant 0 : i32
    return %c0_i32, %c0_i32_0 : i32, i32
  }
  func.func @transform_12(%arg0: i32) -> (i32, i32) {
    %c0_i32 = arith.constant 0 : i32
    %c0_i32_0 = arith.constant 0 : i32
    %c0_i32_1 = arith.constant 0 : i32
    return %c0_i32, %c0_i32_0 : i32, i32
  }
  func.func @transform_13(%arg0: i32) -> (i32, i32) {
    %c0_i32 = arith.constant 0 : i32
    %c0_i32_0 = arith.constant 0 : i32
    %c0_i32_1 = arith.constant 0 : i32
    return %c0_i32, %c0_i32_0 : i32, i32
  }
  func.func @transform_14(%arg0: i32) -> (i32, i32) {
    %c0_i32 = arith.constant 0 : i32
    %c0_i32_0 = arith.constant 0 : i32
    return %c0_i32, %arg0 : i32, i32
  }
}

</mosaic_0001>

<llo_original>
// kernel: tpu_custom_call.1
$region0: #{tpu_custom_call.1}
  #allocation0 [shape = 'u32[]', space=smem, size = 0x4, offset = 0x4, fixed_abs, tag = 'smem constant byte address 0x4 - core index']
  #allocation1 [shape = 'u32[144,128]{1,0:T(1,128)}', space=vmem, size = 0x12000, scoped, tag = 'internal scratch']
  #allocation2 [shape = 'f32[1,1]{1,0:T(1,128)S(1)}', space=vmem, size = 0x200, scoped, tag = 'scoped memory for tpu_custom_call.1']
  %s0 = inlined_call_operand.hbm [shape: f32[8,8], index: 0, kind: input, shape index: {}]
  %s1 = inlined_call_operand.hbm [shape: f32[8,8], index: 1, kind: input, shape index: {}]
  %s2 = inlined_call_operand.hbm [shape: f32[8,16], index: 2, kind: input, shape index: {}]
  %s3 = inlined_call_operand.hbm [shape: f32[8,16], index: 3, kind: input, shape index: {}]
  %s4 = inlined_call_operand.vmem [shape: f32[16,16], index: 4, kind: input, shape index: {}]
  %s5 = inlined_call_operand.vmem [shape: f32[16,16], index: 5, kind: input, shape index: {}]
  %s6 = inlined_call_operand.vmem [shape: f32[1,16], index: 6, kind: input, shape index: {}]
  %s7 = inlined_call_operand.vmem [shape: f32[16,8], index: 7, kind: input, shape index: {}]
  %s8 = inlined_call_operand.vmem [shape: f32[1,8], index: 8, kind: input, shape index: {}]
  %s9 = inlined_call_operand.vmem [shape: f32[8,8], index: 9, kind: input, shape index: {}]
  %s10 = inlined_call_operand.vmem [shape: f32[1,8], index: 10, kind: input, shape index: {}]
  %s11 = inlined_call_operand.vmem [shape: f32[1,8], index: 11, kind: input, shape index: {}]
  %s12 = inlined_call_operand.vmem [shape: f32[1,8], index: 12, kind: input, shape index: {}]
  %s13 = inlined_call_operand.<no memory space> [shape: f32[1,1], index: 13, kind: input, shape index: {}]
  %s14 = inlined_call_operand.hbm [shape: f32[1,8], index: 14, kind: output, shape index: {}]
  %s15 = sld [smem:[#allocation0]]
  $region82: #{tpu_custom_call.1} parent=0
    _
  %s17 = ssub.s32 1, %s15
  %s18 = scalar_select 0, %s17, %s15
  %v19 = vstv %s13
  %20 = vst [vmem:[#allocation2] sm:$0x1] %v19
  $region1: #{tpu_custom_call.1} parent=0
    #allocation3 [shape = 'u8[4096]{0}', space=vmem, size = 0x1000, scoped, tag = 'input window, operand 0, single buffered']
    #allocation4 [shape = 's32[1]{0}', space=sflag, size = 0x4, scoped, tag = 'scoped memory for tpu_custom_call.1']
    #allocation5 [shape = 's32[1]{0}', space=sflag, size = 0x4, scoped, tag = 'scoped memory for tpu_custom_call.1']
    #allocation6 [shape = 'u8[4096]{0}', space=vmem, size = 0x1000, scoped, tag = 'input window, operand 1, single buffered']
    #allocation7 [shape = 's32[1]{0}', space=sflag, size = 0x4, scoped, tag = 'scoped memory for tpu_custom_call.1']
    #allocation8 [shape = 'u8[4096]{0}', space=vmem, size = 0x1000, scoped, tag = 'input window, operand 2, single buffered']
    #allocation9 [shape = 'u8[4096]{0}', space=vmem, size = 0x1000, scoped, tag = 'input window, operand 3, single buffered']
    #allocation10 [shape = 's32[1]{0}', space=sflag, size = 0x4, scoped, tag = 'scoped memory for tpu_custom_call.1']
    #allocation11 [shape = 'u8[512]{0}', space=vmem, size = 0x400, scoped, tag = 'output window, operand 0, single buffered']
    %21 = vsyncpa [#allocation4], 0
    %22 = vsyncpa [#allocation7], 0
    %23 = vsyncpa [#allocation10], 0
    %24 = vsyncpa [#allocation5], 0
    // Predicated region
    $region2: #{tpu_custom_call.1} parent=1 // pred_check
      _
    $region3: #{tpu_custom_call.1} parent=1 // pred_check_branch
      %26 = sbr.rel (0) target = $region5
    $region4: #{tpu_custom_call.1} parent=1 // pred_region
      %s28 = ssub.s32 128, 128
      %29 = vsyncadd [#allocation4], %s28
      %s31 = sshll.u32 [#allocation3], 4
      %s32 = int_to_ptr.vmem [resolvable:$true] %s31
      %34 = dma.hbm_to_vmem [thread:$0]  %s0, 128, %s32, [#allocation4]
    $region5: #{tpu_custom_call.1} parent=1 // pred_fallthru
      _
    // Predicated region
    $region6: #{tpu_custom_call.1} parent=1 // pred_check
      _
    $region7: #{tpu_custom_call.1} parent=1 // pred_check_branch
      %36 = sbr.rel (0) target = $region9
    $region8: #{tpu_custom_call.1} parent=1 // pred_region
      %s38 = ssub.s32 128, 128
      %39 = vsyncadd [#allocation7], %s38
      %s41 = sshll.u32 [#allocation6], 4
      %s42 = int_to_ptr.vmem [resolvable:$true] %s41
      %44 = dma.hbm_to_vmem [thread:$0]  %s1, 128, %s42, [#allocation7]
    $region9: #{tpu_custom_call.1} parent=1 // pred_fallthru
      _
    // Predicated region
    $region10: #{tpu_custom_call.1} parent=1 // pred_check
      _
    $region11: #{tpu_custom_call.1} parent=1 // pred_check_branch
      %46 = sbr.rel (0) target = $region13
    $region12: #{tpu_custom_call.1} parent=1 // pred_region
      %s48 = ssub.s32 128, 128
      %49 = vsyncadd [#allocation7], %s48
      %s51 = sshll.u32 [#allocation8], 4
      %s52 = int_to_ptr.vmem [resolvable:$true] %s51
      %54 = dma.hbm_to_vmem [thread:$0]  %s2, 128, %s52, [#allocation7]
    $region13: #{tpu_custom_call.1} parent=1 // pred_fallthru
      _
    // Predicated region
    $region14: #{tpu_custom_call.1} parent=1 // pred_check
      _
    $region15: #{tpu_custom_call.1} parent=1 // pred_check_branch
      %56 = sbr.rel (0) target = $region17
    $region16: #{tpu_custom_call.1} parent=1 // pred_region
      %s58 = ssub.s32 128, 128
      %59 = vsyncadd [#allocation10], %s58
      %s61 = sshll.u32 [#allocation9], 4
      %s62 = int_to_ptr.vmem [resolvable:$true] %s61
      %64 = dma.hbm_to_vmem [thread:$0]  %s3, 128, %s62, [#allocation10]
    $region17: #{tpu_custom_call.1} parent=1 // pred_fallthru
      _
    // Predicated region
    $region18: #{tpu_custom_call.1} parent=1 // pred_check
      _
    $region19: #{tpu_custom_call.1} parent=1 // pred_check_branch
      %66 = sbr.rel (0) target = $region21
    $region20: #{tpu_custom_call.1} parent=1 // pred_region
      _
    $region21: #{tpu_custom_call.1} parent=1 // pred_fallthru
      _
    // Predicated region
    $region22: #{tpu_custom_call.1} parent=1 // pred_check
      _
    $region23: #{tpu_custom_call.1} parent=1 // pred_check_branch
      %68 = sbr.rel (0) target = $region25
    $region24: #{tpu_custom_call.1} parent=1 // pred_region
      _
    $region25: #{tpu_custom_call.1} parent=1 // pred_fallthru
      _
    // Predicated region
    $region26: #{tpu_custom_call.1} parent=1 // pred_check
      _
    $region27: #{tpu_custom_call.1} parent=1 // pred_check_branch
      %70 = sbr.rel (0) target = $region29
    $region28: #{tpu_custom_call.1} parent=1 // pred_region
      _
    $region29: #{tpu_custom_call.1} parent=1 // pred_fallthru
      _
    // Predicated region
    $region30: #{tpu_custom_call.1} parent=1 // pred_check
      _
    $region31: #{tpu_custom_call.1} parent=1 // pred_check_branch
      %72 = sbr.rel (0) target = $region33
    $region32: #{tpu_custom_call.1} parent=1 // pred_region
      _
    $region33: #{tpu_custom_call.1} parent=1 // pred_fallthru
      _
    // Predicated region
    $region34: #{tpu_custom_call.1} parent=1 // pred_check
      _
    $region35: #{tpu_custom_call.1} parent=1 // pred_check_branch
      %74 = sbr.rel (0) target = $region37
    $region36: #{tpu_custom_call.1} parent=1 // pred_region
      _
    $region37: #{tpu_custom_call.1} parent=1 // pred_fallthru
      _
    // Predicated region
    $region38: #{tpu_custom_call.1} parent=1 // pred_check
      _
    $region39: #{tpu_custom_call.1} parent=1 // pred_check_branch
      %76 = sbr.rel (0) target = $region41
    $region40: #{tpu_custom_call.1} parent=1 // pred_region
      _
    $region41: #{tpu_custom_call.1} parent=1 // pred_fallthru
      _
    // Predicated region
    $region42: #{tpu_custom_call.1} parent=1 // pred_check
      _
    $region43: #{tpu_custom_call.1} parent=1 // pred_check_branch
      %78 = sbr.rel (0) target = $region45
    $region44: #{tpu_custom_call.1} parent=1 // pred_region
      _
    $region45: #{tpu_custom_call.1} parent=1 // pred_fallthru
      _
    // Predicated region
    $region46: #{tpu_custom_call.1} parent=1 // pred_check
      _
    $region47: #{tpu_custom_call.1} parent=1 // pred_check_branch
      %80 = sbr.rel (0) target = $region49
    $region48: #{tpu_custom_call.1} parent=1 // pred_region
      _
    $region49: #{tpu_custom_call.1} parent=1 // pred_fallthru
      _
    // Predicated region
    $region50: #{tpu_custom_call.1} parent=1 // pred_check
      _
    $region51: #{tpu_custom_call.1} parent=1 // pred_check_branch
      %82 = sbr.rel (0) target = $region53
    $region52: #{tpu_custom_call.1} parent=1 // pred_region
      _
    $region53: #{tpu_custom_call.1} parent=1 // pred_fallthru
      _
    // Predicated region
    $region54: #{tpu_custom_call.1} parent=1 // pred_check
      _
    $region55: #{tpu_custom_call.1} parent=1 // pred_check_branch
      %84 = sbr.rel (0) target = $region57
    $region56: #{tpu_custom_call.1} parent=1 // pred_region
      _
    $region57: #{tpu_custom_call.1} parent=1 // pred_fallthru
      _
    // Predicated region
    $region58: #{tpu_custom_call.1} parent=1 // pred_check
      _
    $region59: #{tpu_custom_call.1} parent=1 // pred_check_branch
      %86 = sbr.rel (0) target = $region61
    $region60: #{tpu_custom_call.1} parent=1 // pred_region
      %87 = dma.done [#allocation4], 128
    $region61: #{tpu_custom_call.1} parent=1 // pred_fallthru
      _
    // Predicated region
    $region62: #{tpu_custom_call.1} parent=1 // pred_check
      _
    $region63: #{tpu_custom_call.1} parent=1 // pred_check_branch
      %89 = sbr.rel (0) target = $region65
    $region64: #{tpu_custom_call.1} parent=1 // pred_region
      %90 = dma.done [#allocation7], 128
    $region65: #{tpu_custom_call.1} parent=1 // pred_fallthru
      _
    // Predicated region
    $region66: #{tpu_custom_call.1} parent=1 // pred_check
      _
    $region67: #{tpu_custom_call.1} parent=1 // pred_check_branch
      %92 = sbr.rel (0) target = $region69
    $region68: #{tpu_custom_call.1} parent=1 // pred_region
      %93 = dma.done [#allocation7], 128
    $region69: #{tpu_custom_call.1} parent=1 // pred_fallthru
      _
    // Predicated region
    $region70: #{tpu_custom_call.1} parent=1 // pred_check
      _
    $region71: #{tpu_custom_call.1} parent=1 // pred_check_branch
      %95 = sbr.rel (0) target = $region73
    $region72: #{tpu_custom_call.1} parent=1 // pred_region
      %96 = dma.done [#allocation10], 128
    $region73: #{tpu_custom_call.1} parent=1 // pred_fallthru
      _
    %v97 = vld [vmem:[#allocation3] sm:$0xff]
    %v98 = vld [vmem:[#allocation6] sm:$0xff]
    %v99 = vmul.f32 %v97, %v98
    %v100 = vld [vmem:[#allocation8] sm:$0xff]
    %v101 = vld [vmem:[%s4] sm:$0xff]
    %v102 = vld [vmem:[%s4 + $0x8] sm:$0xff]
    %v103 = vld [vmem:[#allocation9] sm:$0xff]
    %v104 = vld [vmem:[%s5] sm:$0xff]
    %v105 = vld [vmem:[%s5 + $0x8] sm:$0xff]
    %vm106 = vcmask 130048
    %v108 = vsel %vm106, %v103, 0
    %110 = vmatprep.subr.mxu0 0.0
    %111 = vmatpush1.msra.mxu0 %v104
    %112 = vmatprep.subr.mxu0 0.0
    %113 = vmatpush1.msra.mxu0 %v105
    %114 = vmatprep.subr.mxu0 0.0
    %115 = vmatpush1.msra.mxu0 0.0
    %116 = vmatprep.subr.mxu0 0.0
    %117 = vmatpush1.msra.mxu0 0.0
    %118 = vmatprep.subr.mxu0 0.0
    %119 = vmatpush1.msra.mxu0 0.0
    %120 = vmatprep.subr.mxu0 0.0
    %121 = vmatpush1.msra.mxu0 0.0
    %122 = vmatprep.subr.mxu0 0.0
    %123 = vmatpush1.msra.mxu0 0.0
    %124 = vmatprep.subr.mxu0 0.0
    %125 = vmatpush1.msra.mxu0 0.0
    %126 = vmatprep.subr.mxu0 0.0
    %127 = vmatpush1.msra.mxu0 0.0
    %128 = vmatprep.subr.mxu0 0.0
    %129 = vmatpush1.msra.mxu0 0.0
    %130 = vmatprep.subr.mxu0 0.0
    %131 = vmatpush1.msra.mxu0 0.0
    %132 = vmatprep.subr.mxu0 0.0
    %133 = vmatpush1.msra.mxu0 0.0
    %134 = vmatprep.subr.mxu0 0.0
    %135 = vmatpush1.msra.mxu0 0.0
    %136 = vmatprep.subr.mxu0 0.0
    %137 = vmatpush1.msra.mxu0 0.0
    %138 = vmatprep.subr.mxu0 0.0
    %139 = vmatpush1.msra.mxu0 0.0
    %140 = vmatprep.subr.mxu0 0.0
    %141 = vmatpush1.msra.mxu0 0.0
    %142 = vmatprep.subr.mxu0 0.0
    %143 = vmatpush1.msra.mxu0 0.0
    %144 = vmatprep.subr.mxu0 0.0
    %145 = vmatpush1.msra.mxu0 0.0
    %146 = vmatprep.subr.mxu0 0.0
    %147 = vmatpush1.msra.mxu0 0.0
    %148 = vmatprep.subr.mxu0 0.0
    %149 = vmatpush1.msra.mxu0 0.0
    %150 = vmatprep.subr.mxu0 0.0
    %151 = vmatpush1.msra.mxu0 0.0
    %152 = vmatprep.subr.mxu0 0.0
    %153 = vmatpush1.msra.mxu0 0.0
    %154 = vmatprep.subr.mxu0 0.0
    %155 = vmatpush1.msra.mxu0 0.0
    %156 = vmatprep.subr.mxu0 0.0
    %157 = vmatpush1.msra.mxu0 0.0
    %158 = vmatprep.subr.mxu0 0.0
    %159 = vmatpush1.msra.mxu0 0.0
    %160 = vmatprep.subr.mxu0 0.0
    %161 = vmatpush1.msra.mxu0 0.0
    %162 = vmatprep.subr.mxu0 0.0
    %163 = vmatpush1.msra.mxu0 0.0
    %164 = vmatprep.subr.mxu0 0.0
    %165 = vmatpush1.msra.mxu0 0.0
    %166 = vmatprep.subr.mxu0 0.0
    %167 = vmatpush1.msra.mxu0 0.0
    %168 = vmatprep.subr.mxu0 0.0
    %169 = vmatpush1.msra.mxu0 0.0
    %170 = vmatprep.subr.mxu0 0.0
    %171 = vmatpush1.msra.mxu0 0.0
    %172 = vmatprep.subr.mxu0 0.0
    %173 = vmatpush1.msra.mxu0 0.0
    %174 = vmatprep.mubr.f32.mxu0 0.0
    %175 = vmatmul.mubr.f32.gmra.mrb[0].mxu0 %v108
    %v176 = vpop.f32.mrb[0].mxu0
    %v177 = vadd.f32 0.0, %v176
    %v178 = vpop.f32.mrb[0].mxu0
    %179 = vdwg.mxu0
    %v181 = vsel %vm106, %v100, 0
    %183 = vmatprep.subr.mxu0 0.0
    %184 = vmatpush1.msra.mxu0 %v101
    %185 = vmatprep.subr.mxu0 0.0
    %186 = vmatpush1.msra.mxu0 %v102
    %187 = vmatprep.subr.mxu0 0.0
    %188 = vmatpush1.msra.mxu0 0.0
    %189 = vmatprep.subr.mxu0 0.0
    %190 = vmatpush1.msra.mxu0 0.0
    %191 = vmatprep.subr.mxu0 0.0
    %192 = vmatpush1.msra.mxu0 0.0
    %193 = vmatprep.subr.mxu0 0.0
    %194 = vmatpush1.msra.mxu0 0.0
    %195 = vmatprep.subr.mxu0 0.0
    %196 = vmatpush1.msra.mxu0 0.0
    %197 = vmatprep.subr.mxu0 0.0
    %198 = vmatpush1.msra.mxu0 0.0
    %199 = vmatprep.subr.mxu0 0.0
    %200 = vmatpush1.msra.mxu0 0.0
    %201 = vmatprep.subr.mxu0 0.0
    %202 = vmatpush1.msra.mxu0 0.0
    %203 = vmatprep.subr.mxu0 0.0
    %204 = vmatpush1.msra.mxu0 0.0
    %205 = vmatprep.subr.mxu0 0.0
    %206 = vmatpush1.msra.mxu0 0.0
    %207 = vmatprep.subr.mxu0 0.0
    %208 = vmatpush1.msra.mxu0 0.0
    %209 = vmatprep.subr.mxu0 0.0
    %210 = vmatpush1.msra.mxu0 0.0
    %211 = vmatprep.subr.mxu0 0.0
    %212 = vmatpush1.msra.mxu0 0.0
    %213 = vmatprep.subr.mxu0 0.0
    %214 = vmatpush1.msra.mxu0 0.0
    %215 = vmatprep.subr.mxu0 0.0
    %216 = vmatpush1.msra.mxu0 0.0
    %217 = vmatprep.subr.mxu0 0.0
    %218 = vmatpush1.msra.mxu0 0.0
    %219 = vmatprep.subr.mxu0 0.0
    %220 = vmatpush1.msra.mxu0 0.0
    %221 = vmatprep.subr.mxu0 0.0
    %222 = vmatpush1.msra.mxu0 0.0
    %223 = vmatprep.subr.mxu0 0.0
    %224 = vmatpush1.msra.mxu0 0.0
    %225 = vmatprep.subr.mxu0 0.0
    %226 = vmatpush1.msra.mxu0 0.0
    %227 = vmatprep.subr.mxu0 0.0
    %228 = vmatpush1.msra.mxu0 0.0
    %229 = vmatprep.subr.mxu0 0.0
    %230 = vmatpush1.msra.mxu0 0.0
    %231 = vmatprep.subr.mxu0 0.0
    %232 = vmatpush1.msra.mxu0 0.0
    %233 = vmatprep.subr.mxu0 0.0
    %234 = vmatpush1.msra.mxu0 0.0
    %235 = vmatprep.subr.mxu0 0.0
    %236 = vmatpush1.msra.mxu0 0.0
    %237 = vmatprep.subr.mxu0 0.0
    %238 = vmatpush1.msra.mxu0 0.0
    %239 = vmatprep.subr.mxu0 0.0
    %240 = vmatpush1.msra.mxu0 0.0
    %241 = vmatprep.subr.mxu0 0.0
    %242 = vmatpush1.msra.mxu0 0.0
    %243 = vmatprep.subr.mxu0 0.0
    %244 = vmatpush1.msra.mxu0 0.0
    %245 = vmatprep.subr.mxu0 0.0
    %246 = vmatpush1.msra.mxu0 0.0
    %247 = vmatprep.mubr.f32.mxu0 0.0
    %248 = vmatmul.mubr.f32.gmra.mrb[0].mxu0 %v181
    %v249 = vpop.f32.mrb[0].mxu0
    %v250 = vadd.f32 %v177, %v249
    %v251 = vpop.f32.mrb[0].mxu0
    %252 = vdwg.mxu0
    %v253 = vld [vmem:[%s6] sm:$0x1]
    %v255 = vlaneseq
    %v256 = vshrl.u32 %v255, 7
    %v257 = vsub.s32 0, %v256
    %v258 = vrot.slane %v253, %v257
    %v260 = vadd.f32 %v250, %v258
    %v261 = vmax.f32 %v260, 0.0
    %v262 = vld [vmem:[%s7] sm:$0xff]
    %v263 = vld [vmem:[%s7 + $0x8] sm:$0xff]
    %v264 = vld [vmem:[%s8] sm:$0x1]
    %v266 = vlaneseq
    %v267 = vshrl.u32 %v266, 7
    %v268 = vsub.s32 0, %v267
    %v269 = vrot.slane %v264, %v268
    %v272 = vsel %vm106, %v261, 0
    %274 = vmatprep.subr.mxu0 0.0
    %275 = vmatpush1.msra.mxu0 %v262
    %276 = vmatprep.subr.mxu0 0.0
    %277 = vmatpush1.msra.mxu0 %v263
    %278 = vmatprep.subr.mxu0 0.0
    %279 = vmatpush1.msra.mxu0 0.0
    %280 = vmatprep.subr.mxu0 0.0
    %281 = vmatpush1.msra.mxu0 0.0
    %282 = vmatprep.subr.mxu0 0.0
    %283 = vmatpush1.msra.mxu0 0.0
    %284 = vmatprep.subr.mxu0 0.0
    %285 = vmatpush1.msra.mxu0 0.0
    %286 = vmatprep.subr.mxu0 0.0
    %287 = vmatpush1.msra.mxu0 0.0
    %288 = vmatprep.subr.mxu0 0.0
    %289 = vmatpush1.msra.mxu0 0.0
    %290 = vmatprep.subr.mxu0 0.0
    %291 = vmatpush1.msra.mxu0 0.0
    %292 = vmatprep.subr.mxu0 0.0
    %293 = vmatpush1.msra.mxu0 0.0
    %294 = vmatprep.subr.mxu0 0.0
    %295 = vmatpush1.msra.mxu0 0.0
    %296 = vmatprep.subr.mxu0 0.0
    %297 = vmatpush1.msra.mxu0 0.0
    %298 = vmatprep.subr.mxu0 0.0
    %299 = vmatpush1.msra.mxu0 0.0
    %300 = vmatprep.subr.mxu0 0.0
    %301 = vmatpush1.msra.mxu0 0.0
    %302 = vmatprep.subr.mxu0 0.0
    %303 = vmatpush1.msra.mxu0 0.0
    %304 = vmatprep.subr.mxu0 0.0
    %305 = vmatpush1.msra.mxu0 0.0
    %306 = vmatprep.subr.mxu0 0.0
    %307 = vmatpush1.msra.mxu0 0.0
    %308 = vmatprep.subr.mxu0 0.0
    %309 = vmatpush1.msra.mxu0 0.0
    %310 = vmatprep.subr.mxu0 0.0
    %311 = vmatpush1.msra.mxu0 0.0
    %312 = vmatprep.subr.mxu0 0.0
    %313 = vmatpush1.msra.mxu0 0.0
    %314 = vmatprep.subr.mxu0 0.0
    %315 = vmatpush1.msra.mxu0 0.0
    %316 = vmatprep.subr.mxu0 0.0
    %317 = vmatpush1.msra.mxu0 0.0
    %318 = vmatprep.subr.mxu0 0.0
    %319 = vmatpush1.msra.mxu0 0.0
    %320 = vmatprep.subr.mxu0 0.0
    %321 = vmatpush1.msra.mxu0 0.0
    %322 = vmatprep.subr.mxu0 0.0
    %323 = vmatpush1.msra.mxu0 0.0
    %324 = vmatprep.subr.mxu0 0.0
    %325 = vmatpush1.msra.mxu0 0.0
    %326 = vmatprep.subr.mxu0 0.0
    %327 = vmatpush1.msra.mxu0 0.0
    %328 = vmatprep.subr.mxu0 0.0
    %329 = vmatpush1.msra.mxu0 0.0
    %330 = vmatprep.subr.mxu0 0.0
    %331 = vmatpush1.msra.mxu0 0.0
    %332 = vmatprep.subr.mxu0 0.0
    %333 = vmatpush1.msra.mxu0 0.0
    %334 = vmatprep.subr.mxu0 0.0
    %335 = vmatpush1.msra.mxu0 0.0
    %336 = vmatprep.subr.mxu0 0.0
    %337 = vmatpush1.msra.mxu0 0.0
    %338 = vmatprep.mubr.f32.mxu0 0.0
    %339 = vmatmul.mubr.f32.gmra.mrb[0].mxu0 %v272
    %v340 = vpop.f32.mrb[0].mxu0
    %v341 = vadd.f32 %v269, %v340
    %v342 = vpop.f32.mrb[0].mxu0
    %343 = vdwg.mxu0
    %v344 = vmax.f32 %v341, 0.0
    %v345 = vld [vmem:[%s9] sm:$0xff]
    %v346 = vld [vmem:[%s10] sm:$0x1]
    %v348 = vlaneseq
    %v349 = vshrl.u32 %v348, 7
    %v350 = vsub.s32 0, %v349
    %v351 = vrot.slane %v346, %v350
    %vm353 = vcmask 64512
    %v355 = vsel %vm353, %v344, 0
    %357 = vmatprep.subr.mxu0 0.0
    %358 = vmatpush1.msra.mxu0 %v345
    %359 = vmatprep.subr.mxu0 0.0
    %360 = vmatpush1.msra.mxu0 0.0
    %361 = vmatprep.subr.mxu0 0.0
    %362 = vmatpush1.msra.mxu0 0.0
    %363 = vmatprep.subr.mxu0 0.0
    %364 = vmatpush1.msra.mxu0 0.0
    %365 = vmatprep.subr.mxu0 0.0
    %366 = vmatpush1.msra.mxu0 0.0
    %367 = vmatprep.subr.mxu0 0.0
    %368 = vmatpush1.msra.mxu0 0.0
    %369 = vmatprep.subr.mxu0 0.0
    %370 = vmatpush1.msra.mxu0 0.0
    %371 = vmatprep.subr.mxu0 0.0
    %372 = vmatpush1.msra.mxu0 0.0
    %373 = vmatprep.subr.mxu0 0.0
    %374 = vmatpush1.msra.mxu0 0.0
    %375 = vmatprep.subr.mxu0 0.0
    %376 = vmatpush1.msra.mxu0 0.0
    %377 = vmatprep.subr.mxu0 0.0
    %378 = vmatpush1.msra.mxu0 0.0
    %379 = vmatprep.subr.mxu0 0.0
    %380 = vmatpush1.msra.mxu0 0.0
    %381 = vmatprep.subr.mxu0 0.0
    %382 = vmatpush1.msra.mxu0 0.0
    %383 = vmatprep.subr.mxu0 0.0
    %384 = vmatpush1.msra.mxu0 0.0
    %385 = vmatprep.subr.mxu0 0.0
    %386 = vmatpush1.msra.mxu0 0.0
    %387 = vmatprep.subr.mxu0 0.0
    %388 = vmatpush1.msra.mxu0 0.0
    %389 = vmatprep.subr.mxu0 0.0
    %390 = vmatpush1.msra.mxu0 0.0
    %391 = vmatprep.subr.mxu0 0.0
    %392 = vmatpush1.msra.mxu0 0.0
    %393 = vmatprep.subr.mxu0 0.0
    %394 = vmatpush1.msra.mxu0 0.0
    %395 = vmatprep.subr.mxu0 0.0
    %396 = vmatpush1.msra.mxu0 0.0
    %397 = vmatprep.subr.mxu0 0.0
    %398 = vmatpush1.msra.mxu0 0.0
    %399 = vmatprep.subr.mxu0 0.0
    %400 = vmatpush1.msra.mxu0 0.0
    %401 = vmatprep.subr.mxu0 0.0
    %402 = vmatpush1.msra.mxu0 0.0
    %403 = vmatprep.subr.mxu0 0.0
    %404 = vmatpush1.msra.mxu0 0.0
    %405 = vmatprep.subr.mxu0 0.0
    %406 = vmatpush1.msra.mxu0 0.0
    %407 = vmatprep.subr.mxu0 0.0
    %408 = vmatpush1.msra.mxu0 0.0
    %409 = vmatprep.subr.mxu0 0.0
    %410 = vmatpush1.msra.mxu0 0.0
    %411 = vmatprep.subr.mxu0 0.0
    %412 = vmatpush1.msra.mxu0 0.0
    %413 = vmatprep.subr.mxu0 0.0
    %414 = vmatpush1.msra.mxu0 0.0
    %415 = vmatprep.subr.mxu0 0.0
    %416 = vmatpush1.msra.mxu0 0.0
    %417 = vmatprep.subr.mxu0 0.0
    %418 = vmatpush1.msra.mxu0 0.0
    %419 = vmatprep.subr.mxu0 0.0
    %420 = vmatpush1.msra.mxu0 0.0
    %421 = vmatprep.mubr.f32.mxu0 0.0
    %422 = vmatmul.mubr.f32.gmra.mrb[0].mxu0 %v355
    %v423 = vpop.f32.mrb[0].mxu0
    %v424 = vadd.f32 %v351, %v423
    %v425 = vpop.f32.mrb[0].mxu0
    %426 = vdwg.mxu0
    %v427 = vld [vmem:[%s11] sm:$0x1]
    %v428 = vld [vmem:[%s12] sm:$0x1]
    %v430 = vsel %vm353, %v428, 0
    %v433 = vsel %vm353, %v424, 0
    %435 = vmatprep.subr.mxu0 0.0
    %436 = vmatpush1.xpose.msra.mxu0 %v433
    %437 = vmatprep.subr.mxu0 0.0
    %438 = vmatpush1.xpose.msra.mxu0 0.0
    %439 = vmatprep.subr.mxu0 0.0
    %440 = vmatpush1.xpose.msra.mxu0 0.0
    %441 = vmatprep.subr.mxu0 0.0
    %442 = vmatpush1.xpose.msra.mxu0 0.0
    %443 = vmatprep.subr.mxu0 0.0
    %444 = vmatpush1.xpose.msra.mxu0 0.0
    %445 = vmatprep.subr.mxu0 0.0
    %446 = vmatpush1.xpose.msra.mxu0 0.0
    %447 = vmatprep.subr.mxu0 0.0
    %448 = vmatpush1.xpose.msra.mxu0 0.0
    %449 = vmatprep.subr.mxu0 0.0
    %450 = vmatpush1.xpose.msra.mxu0 0.0
    %451 = vmatprep.subr.mxu0 0.0
    %452 = vmatpush1.xpose.msra.mxu0 0.0
    %453 = vmatprep.subr.mxu0 0.0
    %454 = vmatpush1.xpose.msra.mxu0 0.0
    %455 = vmatprep.subr.mxu0 0.0
    %456 = vmatpush1.xpose.msra.mxu0 0.0
    %457 = vmatprep.subr.mxu0 0.0
    %458 = vmatpush1.xpose.msra.mxu0 0.0
    %459 = vmatprep.subr.mxu0 0.0
    %460 = vmatpush1.xpose.msra.mxu0 0.0
    %461 = vmatprep.subr.mxu0 0.0
    %462 = vmatpush1.xpose.msra.mxu0 0.0
    %463 = vmatprep.subr.mxu0 0.0
    %464 = vmatpush1.xpose.msra.mxu0 0.0
    %465 = vmatprep.subr.mxu0 0.0
    %466 = vmatpush1.xpose.msra.mxu0 0.0
    %467 = vmatprep.subr.mxu0 0.0
    %468 = vmatpush1.xpose.msra.mxu0 0.0
    %469 = vmatprep.subr.mxu0 0.0
    %470 = vmatpush1.xpose.msra.mxu0 0.0
    %471 = vmatprep.subr.mxu0 0.0
    %472 = vmatpush1.xpose.msra.mxu0 0.0
    %473 = vmatprep.subr.mxu0 0.0
    %474 = vmatpush1.xpose.msra.mxu0 0.0
    %475 = vmatprep.subr.mxu0 0.0
    %476 = vmatpush1.xpose.msra.mxu0 0.0
    %477 = vmatprep.subr.mxu0 0.0
    %478 = vmatpush1.xpose.msra.mxu0 0.0
    %479 = vmatprep.subr.mxu0 0.0
    %480 = vmatpush1.xpose.msra.mxu0 0.0
    %481 = vmatprep.subr.mxu0 0.0
    %482 = vmatpush1.xpose.msra.mxu0 0.0
    %483 = vmatprep.subr.mxu0 0.0
    %484 = vmatpush1.xpose.msra.mxu0 0.0
    %485 = vmatprep.subr.mxu0 0.0
    %486 = vmatpush1.xpose.msra.mxu0 0.0
    %487 = vmatprep.subr.mxu0 0.0
    %488 = vmatpush1.xpose.msra.mxu0 0.0
    %489 = vmatprep.subr.mxu0 0.0
    %490 = vmatpush1.xpose.msra.mxu0 0.0
    %491 = vmatprep.subr.mxu0 0.0
    %492 = vmatpush1.xpose.msra.mxu0 0.0
    %493 = vmatprep.subr.mxu0 0.0
    %494 = vmatpush1.xpose.msra.mxu0 0.0
    %495 = vmatprep.subr.mxu0 0.0
    %496 = vmatpush1.xpose.msra.mxu0 0.0
    %497 = vmatprep.subr.mxu0 0.0
    %498 = vmatpush1.xpose.msra.mxu0 0.0
    %499 = vmatprep.mubr.f32.mxu0 0.0
    %500 = vmatmul.mubr.f32.gmra.mrb[0].mxu0 %v430
    %v501 = vpop.f32.mrb[0].mxu0
    %v502 = vadd.f32 0.0, %v501
    %v503 = vpop.f32.mrb[0].mxu0
    %504 = vdwg.mxu0
    %v506 = vsel %vm353, %v427, 0
    %v509 = vsel %vm353, %v99, 0
    %511 = vmatprep.subr.mxu0 0.0
    %512 = vmatpush1.xpose.msra.mxu0 %v509
    %513 = vmatprep.subr.mxu0 0.0
    %514 = vmatpush1.xpose.msra.mxu0 0.0
    %515 = vmatprep.subr.mxu0 0.0
    %516 = vmatpush1.xpose.msra.mxu0 0.0
    %517 = vmatprep.subr.mxu0 0.0
    %518 = vmatpush1.xpose.msra.mxu0 0.0
    %519 = vmatprep.subr.mxu0 0.0
    %520 = vmatpush1.xpose.msra.mxu0 0.0
    %521 = vmatprep.subr.mxu0 0.0
    %522 = vmatpush1.xpose.msra.mxu0 0.0
    %523 = vmatprep.subr.mxu0 0.0
    %524 = vmatpush1.xpose.msra.mxu0 0.0
    %525 = vmatprep.subr.mxu0 0.0
    %526 = vmatpush1.xpose.msra.mxu0 0.0
    %527 = vmatprep.subr.mxu0 0.0
    %528 = vmatpush1.xpose.msra.mxu0 0.0
    %529 = vmatprep.subr.mxu0 0.0
    %530 = vmatpush1.xpose.msra.mxu0 0.0
    %531 = vmatprep.subr.mxu0 0.0
    %532 = vmatpush1.xpose.msra.mxu0 0.0
    %533 = vmatprep.subr.mxu0 0.0
    %534 = vmatpush1.xpose.msra.mxu0 0.0
    %535 = vmatprep.subr.mxu0 0.0
    %536 = vmatpush1.xpose.msra.mxu0 0.0
    %537 = vmatprep.subr.mxu0 0.0
    %538 = vmatpush1.xpose.msra.mxu0 0.0
    %539 = vmatprep.subr.mxu0 0.0
    %540 = vmatpush1.xpose.msra.mxu0 0.0
    %541 = vmatprep.subr.mxu0 0.0
    %542 = vmatpush1.xpose.msra.mxu0 0.0
    %543 = vmatprep.subr.mxu0 0.0
    %544 = vmatpush1.xpose.msra.mxu0 0.0
    %545 = vmatprep.subr.mxu0 0.0
    %546 = vmatpush1.xpose.msra.mxu0 0.0
    %547 = vmatprep.subr.mxu0 0.0
    %548 = vmatpush1.xpose.msra.mxu0 0.0
    %549 = vmatprep.subr.mxu0 0.0
    %550 = vmatpush1.xpose.msra.mxu0 0.0
    %551 = vmatprep.subr.mxu0 0.0
    %552 = vmatpush1.xpose.msra.mxu0 0.0
    %553 = vmatprep.subr.mxu0 0.0
    %554 = vmatpush1.xpose.msra.mxu0 0.0
    %555 = vmatprep.subr.mxu0 0.0
    %556 = vmatpush1.xpose.msra.mxu0 0.0
    %557 = vmatprep.subr.mxu0 0.0
    %558 = vmatpush1.xpose.msra.mxu0 0.0
    %559 = vmatprep.subr.mxu0 0.0
    %560 = vmatpush1.xpose.msra.mxu0 0.0
    %561 = vmatprep.subr.mxu0 0.0
    %562 = vmatpush1.xpose.msra.mxu0 0.0
    %563 = vmatprep.subr.mxu0 0.0
    %564 = vmatpush1.xpose.msra.mxu0 0.0
    %565 = vmatprep.subr.mxu0 0.0
    %566 = vmatpush1.xpose.msra.mxu0 0.0
    %567 = vmatprep.subr.mxu0 0.0
    %568 = vmatpush1.xpose.msra.mxu0 0.0
    %569 = vmatprep.subr.mxu0 0.0
    %570 = vmatpush1.xpose.msra.mxu0 0.0
    %571 = vmatprep.subr.mxu0 0.0
    %572 = vmatpush1.xpose.msra.mxu0 0.0
    %573 = vmatprep.subr.mxu0 0.0
    %574 = vmatpush1.xpose.msra.mxu0 0.0
    %575 = vmatprep.mubr.f32.mxu0 0.0
    %576 = vmatmul.mubr.f32.gmra.mrb[0].mxu0 %v506
    %v577 = vpop.f32.mrb[0].mxu0
    %v578 = vadd.f32 %v502, %v577
    %v579 = vpop.f32.mrb[0].mxu0
    %580 = vdwg.mxu0
    %v581 = vld [vmem:[#allocation2] sm:$0x1]
    %583 = vset.pattern.permute.xlu0 0
    %584 = vperm.xlu0 %583, %v581
    %v585 = vpop.permute.xlu0 %584
    %v587 = vlaneseq
    %v588 = vshrl.u32 %v587, 7
    %v589 = vsub.s32 0, %v588
    %v590 = vrot.slane %v585, %v589
    %v591 = vadd.f32 %v578, %v590
    %v592 = vxor.u32 %v591, 2147483648
    %v593 = vmul.f32 %v592, 1.442695
    %v594 = vpow.pop %v593
    %v595 = vadd.f32 %v594, 1.0
    %v596 = vrcp.pop %v595
    %v597 = vmul.f32 1.0, %v596
    %vm598 = vcmask 57344
    %599 = vst.msk [vmem:[#allocation11] sm:$0x1] %vm598, %v597
    // Predicated region
    $region74: #{tpu_custom_call.1} parent=1 // pred_check
      _
    $region75: #{tpu_custom_call.1} parent=1 // pred_check_branch
      %601 = sbr.rel (0) target = $region77
    $region76: #{tpu_custom_call.1} parent=1 // pred_region
      %s603 = ssub.s32 16, 16
      %604 = vsyncadd [#allocation5], %s603
      %s606 = sshll.u32 [#allocation11], 4
      %s607 = int_to_ptr.vmem [resolvable:$true] %s606
      %609 = dma.vmem_to_hbm [thread:$0]  %s607, 16, %s14, [#allocation5]
    $region77: #{tpu_custom_call.1} parent=1 // pred_fallthru
      _
    // Predicated region
    $region78: #{tpu_custom_call.1} parent=1 // pred_check
      _
    $region79: #{tpu_custom_call.1} parent=1 // pred_check_branch
      %611 = sbr.rel (0) target = $region81
    $region80: #{tpu_custom_call.1} parent=1 // pred_region
      %612 = dma.done [#allocation5], 16
    $region81: #{tpu_custom_call.1} parent=1 // pred_fallthru
      _
    %613 = vsyncpa [#allocation4], 1
    %614 = vsyncpa [#allocation7], 1
    %615 = vsyncpa [#allocation10], 1
    %616 = vsyncpa [#allocation5], 1

</llo_original>
